<compile_context>
chip_gen: v7x
topology: tpu7x:2x2x1
jax: 0.10.0
libtpu: 0.0.40
codegen_flags: <defaults>
</compile_context>

<pallas_src>
import math

import jax
import jax.numpy as jnp
from jax.experimental import pallas as pl
from jax.experimental.pallas import tpu as pltpu


def _choose_tiles(n, c, hw, itemsize, *, block_budget_bytes=4 << 20, max_thw=2048):
    """Pick (tn, thw): batch tile and spatial (lane) tile.

    Keeps a single x block <= ~4 MiB so double-buffering stays well inside the
    scoped VMEM limit on every TPU generation (incl. v7x's 64 MiB physical).
    """
    # Batch tile: full batch when small, else 8 (sublane-aligned output block).
    tn = n if n <= 8 else 8
    if hw < 128:
        return tn, hw  # single full-width lane block (equals full dim -> legal)
    # Lane tile: multiple of 128, capped by the per-block byte budget, never
    # larger than the spatial extent (last partial chunk is masked in-kernel).
    budget_lanes = max(128, block_budget_bytes // max(1, tn * c * itemsize))
    thw = max(128, (min(max_thw, budget_lanes) // 128) * 128)
    hw_floor = (hw // 128) * 128
    thw = max(128, min(thw, hw_floor))
    return tn, thw


def _make_kernel(hw, thw):
    needs_mask = (hw % thw) != 0
    inv_hw = 1.0 / float(hw)

    def kernel(x_ref, w1t_ref, w2t_ref, o_ref, sum_acc, max_acc):
        # x_ref:   (tn, C, thw) streamed spatial tile
        # w1t_ref: (C, Cr)   fc[0].weight^T   (resident)
        # w2t_ref: (Cr, C)   fc[2].weight^T   (resident)
        # o_ref:   (tn, C)   sigmoid(fc(avg) + fc(max))
        # sum_acc / max_acc: (tn, C) f32 running pooled accumulators
        k = pl.program_id(1)

        @pl.when(k == 0)
        def _init():
            sum_acc[...] = jnp.zeros_like(sum_acc)
            max_acc[...] = jnp.full_like(max_acc, -jnp.inf)

        # Streaming cast per tile (no whole-tensor f32 copy of the input).
        xf = x_ref[...].astype(jnp.float32)  # (tn, C, thw)

        if needs_mask:
            pos = k * thw + jax.lax.broadcasted_iota(jnp.int32, xf.shape, dimension=2)
            valid = pos < hw
            x_sum = jnp.where(valid, xf, 0.0)
            x_max = jnp.where(valid, xf, -jnp.inf)
        else:
            x_sum = xf
            x_max = xf

        sum_acc[...] = sum_acc[...] + jnp.sum(x_sum, axis=-1)
        max_acc[...] = jnp.maximum(max_acc[...], jnp.max(x_max, axis=-1))

        @pl.when(k == pl.num_programs(1) - 1)
        def _finalize():
            w1t = w1t_ref[...].astype(jnp.float32)  # (C, Cr)
            w2t = w2t_ref[...].astype(jnp.float32)  # (Cr, C)

            def fc(p):  # shared MLP: 1x1 conv -> ReLU -> 1x1 conv (no bias)
                h = jnp.maximum(
                    jnp.dot(p, w1t, preferred_element_type=jnp.float32), 0.0)
                return jnp.dot(h, w2t, preferred_element_type=jnp.float32)

            avg_p = sum_acc[...] * jnp.float32(inv_hw)   # true mean over H*W
            logits = fc(avg_p) + fc(max_acc[...])        # (tn, C)
            o_ref[...] = jax.nn.sigmoid(logits).astype(o_ref.dtype)

    return kernel


def channel_attention_pallas(x, w1, w2, *, tn=None, thw=None,
                             vmem_limit_bytes=48 * 1024 * 1024):
    """x: (N, C, H, W). w1: (Cr, C) = fc[0].weight. w2: (C, Cr) = fc[2].weight.

    Returns (N, C, 1, 1), matching the PyTorch module's forward.
    """
    n, c, h, w = x.shape
    hw = h * w
    cr = w1.shape[0]
    assert w1.shape == (cr, c) and w2.shape == (c, cr)

    itemsize = jnp.dtype(x.dtype).itemsize
    d_tn, d_thw = _choose_tiles(n, c, hw, itemsize)
    tn = d_tn if tn is None else tn
    thw = d_thw if thw is None else thw

    x_flat = x.reshape(n, c, hw)
    w1t = jnp.transpose(w1)  # (C, Cr)
    w2t = jnp.transpose(w2)  # (Cr, C)

    grid = (pl.cdiv(n, tn), pl.cdiv(hw, thw))  # reduction (spatial) axis last

    cost = pl.CostEstimate(
        flops=2 * n * c * hw + 4 * n * c * cr,
        transcendentals=n * c,
        bytes_accessed=n * c * hw * itemsize + (2 * c * cr + n * c) * itemsize,
    )

    out = pl.pallas_call(
        _make_kernel(hw, thw),
        out_shape=jax.ShapeDtypeStruct((n, c), x.dtype),
        grid_spec=pltpu.PrefetchScalarGridSpec(
            num_scalar_prefetch=0,
            grid=grid,
            in_specs=[
                pl.BlockSpec((tn, c, thw), lambda i, k: (i, 0, k)),
                pl.BlockSpec((c, cr), lambda i, k: (0, 0)),   # resident weights
                pl.BlockSpec((cr, c), lambda i, k: (0, 0)),   # resident weights
            ],
            out_specs=pl.BlockSpec((tn, c), lambda i, k: (i, 0)),
            scratch_shapes=[
                pltpu.VMEM((tn, c), jnp.float32),  # running sum of pooled feats
                pltpu.VMEM((tn, c), jnp.float32),  # running max of pooled feats
            ],
        ),
        compiler_params=pltpu.CompilerParams(
            dimension_semantics=("parallel", "arbitrary"),
            vmem_limit_bytes=vmem_limit_bytes,
        ),
        cost_estimate=cost,
    )(x_flat, w1t, w2t)

    return out.reshape(n, c, 1, 1)


def channel_attention_ref(x, w1, w2):
    """Plain-JAX reference mirroring the PyTorch forward."""
    avg_p = jnp.mean(x, axis=(2, 3))  # (N, C)
    max_p = jnp.max(x, axis=(2, 3))   # (N, C)

    def fc(p):
        h = jnp.maximum(p @ w1.T, 0.0)  # (N, Cr)
        return h @ w2.T                 # (N, C)

    out = jax.nn.sigmoid(fc(avg_p) + fc(max_p))
    return out.reshape(x.shape[0], x.shape[1], 1, 1)


if __name__ == "__main__":
    # Small shapes consistent with the module.
    N, C, H, W = 2, 4, 16, 16
    reduction_ratio = 4
    Cr = math.ceil(C / reduction_ratio)  # = 1

    key = jax.random.PRNGKey(0)
    kx, k1, k2 = jax.random.split(key, 3)

    x = jax.random.normal(kx, (N, C, H, W), dtype=jnp.float32)
    # Deterministic synthetic weights for the two bias-free 1x1 convs.
    w1 = jax.random.normal(k1, (Cr, C), dtype=jnp.float32) * 0.5  # fc[0].weight
    w2 = jax.random.normal(k2, (C, Cr), dtype=jnp.float32) * 0.5  # fc[2].weight

    ref = channel_attention_ref(x, w1, w2)

    # 1) default tiling (single spatial step for these tiny shapes)
    out = jax.block_until_ready(channel_attention_pallas(x, w1, w2))
    assert out.shape == (N, C, 1, 1)
    assert jnp.allclose(out, ref, atol=1e-5, rtol=1e-5)

    # 2) forced multi-step spatial streaming (exercises accumulator + pl.when)
    out2 = jax.block_until_ready(channel_attention_pallas(x, w1, w2, thw=128))
    assert jnp.allclose(out2, ref, atol=1e-5, rtol=1e-5)

    # 3) odd spatial size (exercises the partial-tile masking path)
    x3 = jax.random.normal(kx, (N, C, 20, 20), dtype=jnp.float32)
    out3 = jax.block_until_ready(channel_attention_pallas(x3, w1, w2, thw=128))
    ref3 = channel_attention_ref(x3, w1, w2)
    assert jnp.allclose(out3, ref3, atol=1e-5, rtol=1e-5)

    print("KERNEL_OK")
</pallas_src>

<mosaic_0001>
module attributes {stable_mosaic.version = 11 : i64} {
  func.func @kernel(%arg0: i32, %arg1: i32, %arg2: memref<2x4x256xf32, #tpu.memory_space<vmem>>, %arg3: memref<4x1xf32, #tpu.memory_space<vmem>>, %arg4: memref<1x4xf32, #tpu.memory_space<vmem>>, %arg5: memref<2x4xf32, #tpu.memory_space<vmem>>, %arg6: memref<2x4xf32, #tpu.memory_space<vmem>>, %arg7: memref<2x4xf32, #tpu.memory_space<vmem>>) attributes {dimension_semantics = [#tpu.dimension_semantics<parallel>, #tpu.dimension_semantics<arbitrary>], iteration_bounds = array<i64: 1, 1>, scalar_prefetch = 0 : i64, scratch_operands = 2 : i64, tpu.core_type = #tpu.core_type<tc>, window_params = [{transform_indices = @transform_0, window_bounds = array<i64: 2, 4, 256>}, {pipeline_mode = #tpu.pipeline_mode<synchronous>, transform_indices = @transform_1, window_bounds = array<i64: 4, 1>}, {pipeline_mode = #tpu.pipeline_mode<synchronous>, transform_indices = @transform_2, window_bounds = array<i64: 1, 4>}, {transform_indices = @transform_3, window_bounds = array<i64: 2, 4>}]} {
    %c0_i32 = arith.constant 0 : i32
    %0 = arith.cmpi eq, %arg1, %c0_i32 : i32
    %1 = arith.extui %0 : i1 to i32
    %c0_i32_0 = arith.constant 0 : i32
    %2 = arith.cmpi ne, %1, %c0_i32_0 : i32
    scf.if %2 {
      %cst_14 = arith.constant 0.000000e+00 : f32
      %15 = vector.broadcast %cst_14 : f32 to vector<2x4xf32>
      %c0_15 = arith.constant 0 : index
      %c0_16 = arith.constant 0 : index
      %16 = vector.load %arg6[%c0_15, %c0_16] : memref<2x4xf32, #tpu.memory_space<vmem>>, vector<2x4xf32>
      tpu.vector_store %arg6[%c0_15, %c0_16], %15 {strides = array<i32>} : memref<2x4xf32, #tpu.memory_space<vmem>>, vector<2x4xf32>,
      %cst_17 = arith.constant 0xFF800000 : f32
      %17 = vector.broadcast %cst_17 : f32 to vector<2x4xf32>
      %c0_18 = arith.constant 0 : index
      %c0_19 = arith.constant 0 : index
      %18 = vector.load %arg7[%c0_18, %c0_19] : memref<2x4xf32, #tpu.memory_space<vmem>>, vector<2x4xf32>
      tpu.vector_store %arg7[%c0_18, %c0_19], %17 {strides = array<i32>} : memref<2x4xf32, #tpu.memory_space<vmem>>, vector<2x4xf32>,
    } else {
    }
    %c0 = arith.constant 0 : index
    %c0_1 = arith.constant 0 : index
    %c0_2 = arith.constant 0 : index
    %3 = vector.load %arg2[%c0, %c0_1, %c0_2] : memref<2x4x256xf32, #tpu.memory_space<vmem>>, vector<2x4x256xf32>
    %c0_3 = arith.constant 0 : index
    %c0_4 = arith.constant 0 : index
    %4 = vector.load %arg6[%c0_3, %c0_4] : memref<2x4xf32, #tpu.memory_space<vmem>>, vector<2x4xf32>
    %cst = arith.constant dense<0.000000e+00> : vector<2x4xf32>
    %5 = vector.multi_reduction <add>, %3, %cst [2] : vector<2x4x256xf32> to vector<2x4xf32>
    %6 = arith.addf %4, %5 : vector<2x4xf32>
    %c0_5 = arith.constant 0 : index
    %c0_6 = arith.constant 0 : index
    %7 = vector.load %arg6[%c0_5, %c0_6] : memref<2x4xf32, #tpu.memory_space<vmem>>, vector<2x4xf32>
    tpu.vector_store %arg6[%c0_5, %c0_6], %6 {strides = array<i32>} : memref<2x4xf32, #tpu.memory_space<vmem>>, vector<2x4xf32>,
    %c0_7 = arith.constant 0 : index
    %c0_8 = arith.constant 0 : index
    %8 = vector.load %arg7[%c0_7, %c0_8] : memref<2x4xf32, #tpu.memory_space<vmem>>, vector<2x4xf32>
    %cst_9 = arith.constant dense<0xFF800000> : vector<2x4xf32>
    %9 = vector.multi_reduction <maximumf>, %3, %cst_9 [2] : vector<2x4x256xf32> to vector<2x4xf32>
    %10 = arith.maximumf %8, %9 : vector<2x4xf32>
    %c0_10 = arith.constant 0 : index
    %c0_11 = arith.constant 0 : index
    %11 = vector.load %arg7[%c0_10, %c0_11] : memref<2x4xf32, #tpu.memory_space<vmem>>, vector<2x4xf32>
    tpu.vector_store %arg7[%c0_10, %c0_11], %10 {strides = array<i32>} : memref<2x4xf32, #tpu.memory_space<vmem>>, vector<2x4xf32>,
    %c0_i32_12 = arith.constant 0 : i32
    %12 = arith.cmpi eq, %arg1, %c0_i32_12 : i32
    %13 = arith.extui %12 : i1 to i32
    %c0_i32_13 = arith.constant 0 : i32
    %14 = arith.cmpi ne, %13, %c0_i32_13 : i32
    scf.if %14 {
      %c0_14 = arith.constant 0 : index
      %c0_15 = arith.constant 0 : index
      %15 = vector.load %arg3[%c0_14, %c0_15] : memref<4x1xf32, #tpu.memory_space<vmem>>, vector<4x1xf32>
      %c0_16 = arith.constant 0 : index
      %c0_17 = arith.constant 0 : index
      %16 = vector.load %arg4[%c0_16, %c0_17] : memref<1x4xf32, #tpu.memory_space<vmem>>, vector<1x4xf32>
      %c0_18 = arith.constant 0 : index
      %c0_19 = arith.constant 0 : index
      %17 = vector.load %arg6[%c0_18, %c0_19] : memref<2x4xf32, #tpu.memory_space<vmem>>, vector<2x4xf32>
      %cst_20 = arith.constant 3.906250e-03 : f32
      %18 = vector.broadcast %cst_20 : f32 to vector<2x4xf32>
      %19 = arith.mulf %17, %18 : vector<2x4xf32>
      %cst_21 = arith.constant dense<0.000000e+00> : vector<2x1xf32>
      %20 = tpu.matmul %19, %15, %cst_21 {dimension_numbers = #tpu.dot_dimension_numbers<[1], [0], [0], [1], [0, 0, 1, 1], [], []>} : vector<2x4xf32>, vector<4x1xf32>, vector<2x1xf32> -> vector<2x1xf32>
      %cst_22 = arith.constant 0.000000e+00 : f32
      %21 = vector.broadcast %cst_22 : f32 to vector<2x1xf32>
      %22 = arith.maximumf %20, %21 : vector<2x1xf32>
      %cst_23 = arith.constant dense<0.000000e+00> : vector<2x4xf32>
      %23 = tpu.matmul %22, %16, %cst_23 {dimension_numbers = #tpu.dot_dimension_numbers<[1], [0], [0], [1], [0, 0, 1, 1], [], []>} : vector<2x1xf32>, vector<1x4xf32>, vector<2x4xf32> -> vector<2x4xf32>
      %c0_24 = arith.constant 0 : index
      %c0_25 = arith.constant 0 : index
      %24 = vector.load %arg7[%c0_24, %c0_25] : memref<2x4xf32, #tpu.memory_space<vmem>>, vector<2x4xf32>
      %cst_26 = arith.constant dense<0.000000e+00> : vector<2x1xf32>
      %25 = tpu.matmul %24, %15, %cst_26 {dimension_numbers = #tpu.dot_dimension_numbers<[1], [0], [0], [1], [0, 0, 1, 1], [], []>} : vector<2x4xf32>, vector<4x1xf32>, vector<2x1xf32> -> vector<2x1xf32>
      %cst_27 = arith.constant 0.000000e+00 : f32
      %26 = vector.broadcast %cst_27 : f32 to vector<2x1xf32>
      %27 = arith.maximumf %25, %26 : vector<2x1xf32>
      %cst_28 = arith.constant dense<0.000000e+00> : vector<2x4xf32>
      %28 = tpu.matmul %27, %16, %cst_28 {dimension_numbers = #tpu.dot_dimension_numbers<[1], [0], [0], [1], [0, 0, 1, 1], [], []>} : vector<2x1xf32>, vector<1x4xf32>, vector<2x4xf32> -> vector<2x4xf32>
      %29 = arith.addf %23, %28 : vector<2x4xf32>
      %30 = arith.negf %29 : vector<2x4xf32>
      %31 = math.exp %30 : vector<2x4xf32>
      %cst_29 = arith.constant 1.000000e+00 : f32
      %32 = vector.broadcast %cst_29 : f32 to vector<2x4xf32>
      %33 = arith.addf %32, %31 : vector<2x4xf32>
      %34 = arith.divf %32, %33 : vector<2x4xf32>
      %c0_30 = arith.constant 0 : index
      %c0_31 = arith.constant 0 : index
      %35 = vector.load %arg5[%c0_30, %c0_31] : memref<2x4xf32, #tpu.memory_space<vmem>>, vector<2x4xf32>
      tpu.vector_store %arg5[%c0_30, %c0_31], %34 {strides = array<i32>} : memref<2x4xf32, #tpu.memory_space<vmem>>, vector<2x4xf32>,
    } else {
    }
    return
  }
  func.func @transform_0(%arg0: i32, %arg1: i32) -> (i32, i32, i32) {
    %c0_i32 = arith.constant 0 : i32
    %c0_i32_0 = arith.constant 0 : i32
    return %arg0, %c0_i32, %arg1 : i32, i32, i32
  }
  func.func @transform_1(%arg0: i32, %arg1: i32) -> (i32, i32) {
    %c0_i32 = arith.constant 0 : i32
    %c0_i32_0 = arith.constant 0 : i32
    %c0_i32_1 = arith.constant 0 : i32
    return %c0_i32, %c0_i32_0 : i32, i32
  }
  func.func @transform_2(%arg0: i32, %arg1: i32) -> (i32, i32) {
    %c0_i32 = arith.constant 0 : i32
    %c0_i32_0 = arith.constant 0 : i32
    %c0_i32_1 = arith.constant 0 : i32
    return %c0_i32, %c0_i32_0 : i32, i32
  }
  func.func @transform_3(%arg0: i32, %arg1: i32) -> (i32, i32) {
    %c0_i32 = arith.constant 0 : i32
    %c0_i32_0 = arith.constant 0 : i32
    return %arg0, %c0_i32 : i32, i32
  }
}

</mosaic_0001>

<llo_original>
// kernel: tpu_custom_call.1
$region0: #{tpu_custom_call.1}
  #allocation0 [shape = 'u32[]', space=smem, size = 0x4, offset = 0x4, fixed_abs, tag = 'smem constant byte address 0x4 - core index']
  #allocation1 [shape = 'u32[144,128]{1,0:T(1,128)}', space=vmem, size = 0x12000, scoped, tag = 'internal scratch']
  #allocation2 [shape = 'f32[2,4]{1,0:T(2,128)}', space=vmem, size = 0x400, scoped, tag = 'scratch operand']
  #allocation3 [shape = 'f32[2,4]{1,0:T(2,128)}', space=vmem, size = 0x400, scoped, tag = 'scratch operand']
  %s0 = inlined_call_operand.hbm [shape: f32[2,4,256], index: 0, kind: input, shape index: {}]
  %s1 = inlined_call_operand.vmem [shape: f32[4,1], index: 1, kind: input, shape index: {}]
  %s2 = inlined_call_operand.vmem [shape: f32[1,4], index: 2, kind: input, shape index: {}]
  %s3 = inlined_call_operand.hbm [shape: f32[2,4], index: 3, kind: output, shape index: {}]
  %s4 = sld [smem:[#allocation0]]
  $region34: #{tpu_custom_call.1} parent=0
    _
  %s6 = ssub.s32 1, %s4
  %s7 = scalar_select 0, %s6, %s4
  $region1: #{tpu_custom_call.1} parent=0
    #allocation4 [shape = 'u8[8192]{0}', space=vmem, size = 0x2000, scoped, tag = 'input window, operand 0, single buffered']
    #allocation5 [shape = 's32[1]{0}', space=sflag, size = 0x4, scoped, tag = 'scoped memory for tpu_custom_call.1']
    #allocation6 [shape = 's32[1]{0}', space=sflag, size = 0x4, scoped, tag = 'scoped memory for tpu_custom_call.1']
    #allocation7 [shape = 'u8[1024]{0}', space=vmem, size = 0x400, scoped, tag = 'output window, operand 0, single buffered']
    %8 = vsyncpa [#allocation5], 0
    %9 = vsyncpa [#allocation6], 0
    // Predicated region
    $region2: #{tpu_custom_call.1} parent=1 // pred_check
      _
    $region3: #{tpu_custom_call.1} parent=1 // pred_check_branch
      %11 = sbr.rel (0) target = $region5
    $region4: #{tpu_custom_call.1} parent=1 // pred_region
      %s13 = ssub.s32 256, 256
      %14 = vsyncadd [#allocation5], %s13
      %s15 = sshll.u32 [#allocation4], 4
      %s16 = int_to_ptr.vmem [resolvable:$true] %s15
      %21 = dma.hbm_to_vmem [thread:$0]  %s0, 256, %s16, [#allocation5], 128, 128, 8
    $region5: #{tpu_custom_call.1} parent=1 // pred_fallthru
      _
    // Predicated region
    $region6: #{tpu_custom_call.1} parent=1 // pred_check
      _
    $region7: #{tpu_custom_call.1} parent=1 // pred_check_branch
      %23 = sbr.rel (0) target = $region9
    $region8: #{tpu_custom_call.1} parent=1 // pred_region
      _
    $region9: #{tpu_custom_call.1} parent=1 // pred_fallthru
      _
    // Predicated region
    $region10: #{tpu_custom_call.1} parent=1 // pred_check
      _
    $region11: #{tpu_custom_call.1} parent=1 // pred_check_branch
      %25 = sbr.rel (0) target = $region13
    $region12: #{tpu_custom_call.1} parent=1 // pred_region
      _
    $region13: #{tpu_custom_call.1} parent=1 // pred_fallthru
      _
    // Predicated region
    $region14: #{tpu_custom_call.1} parent=1 // pred_check
      _
    $region15: #{tpu_custom_call.1} parent=1 // pred_check_branch
      %27 = sbr.rel (0) target = $region17
    $region16: #{tpu_custom_call.1} parent=1 // pred_region
      %28 = dma.done [#allocation5], 256
    $region17: #{tpu_custom_call.1} parent=1 // pred_fallthru
      _
    %p29 = scmp.eq.s32.totalorder 0, 0
    // Predicated region
    $region18: #{tpu_custom_call.1} parent=1 // pred_check
      %p30 = pneg %p29
    $region19: #{tpu_custom_call.1} parent=1 // pred_check_branch
      %32 = sbr.rel (%p30) target = $region21
    $region20: #{tpu_custom_call.1} parent=1 // pred_region
      %vm33 = vcmask 25600
      %34 = vst.msk [vmem:[#allocation2] sm:$0x3] %vm33, 0.0
      %35 = vst.msk [vmem:[#allocation3] sm:$0x3] %vm33, -inf
    $region21: #{tpu_custom_call.1} parent=1 // pred_fallthru
      _
    %v36 = vld [vmem:[#allocation4] sm:$0xff]
    %v37 = vld [vmem:[#allocation4 + $0x8] sm:$0xff]
    %v38 = vld [vmem:[#allocation2] sm:$0x3]
    %v41 = vcombine.high %v36, %v36
    %v42 = vcombine.high %v37, %v37
    %vm45 = vcmask 1043456
    %v46 = vsel %vm45, %v36, 0.0
    %v47 = vsel %vm45, %v41, 0.0
    %v48 = vadd.f32 %v46, %v47
    %49 = vadd.xlane.f32.xlu0 %v48
    %v50 = vpop.xlane.xlu0 %49
    %v51 = vsel %vm45, %v37, 0.0
    %v52 = vsel %vm45, %v42, 0.0
    %v53 = vadd.f32 %v51, %v52
    %54 = vadd.xlane.f32.xlu0 %v53
    %v55 = vpop.xlane.xlu0 %54
    %v58 = vlaneseq
    %v59 = vand.u32 %v58, 127
    %v60 = vlaneseq
    %v61 = vshrl.u32 %v60, 7
    %v62 = vsub.s32 %v59, %v61
    %v63 = vrot.slane %v50, %v62
    %v64 = vlaneseq
    %v65 = vshrl.u32 %v64, 7
    %v66 = vsub.s32 %v59, %v65
    %v67 = vrot.slane %v55, %v66
    %vm68 = vcmask 1041409
    %v69 = vsel %vm68, %v67, %v63
    %v71 = vadd.f32 %v38, %v69
    %vm72 = vcmask 25600
    %73 = vst.msk [vmem:[#allocation2] sm:$0x3] %vm72, %v71
    %v74 = vld [vmem:[#allocation3] sm:$0x3]
    %v75 = vsel %vm45, %v36, -inf
    %v76 = vsel %vm45, %v41, -inf
    %v77 = vmax.f32 %v75, %v76
    %78 = vmax.xlane.f32.xlu0 %v77
    %v79 = vpop.xlane.xlu0 %78
    %v80 = vsel %vm45, %v37, -inf
    %v81 = vsel %vm45, %v42, -inf
    %v82 = vmax.f32 %v80, %v81
    %83 = vmax.xlane.f32.xlu0 %v82
    %v84 = vpop.xlane.xlu0 %83
    %v87 = vlaneseq
    %v88 = vshrl.u32 %v87, 7
    %v89 = vsub.s32 %v59, %v88
    %v90 = vrot.slane %v79, %v89
    %v91 = vlaneseq
    %v92 = vshrl.u32 %v91, 7
    %v93 = vsub.s32 %v59, %v92
    %v94 = vrot.slane %v84, %v93
    %v95 = vsel %vm68, %v94, %v90
    %v97 = vmax.f32 %v74, %v95
    %98 = vst.msk [vmem:[#allocation3] sm:$0x3] %vm72, %v97
    // Predicated region
    $region22: #{tpu_custom_call.1} parent=1 // pred_check
      %p99 = pneg %p29
    $region23: #{tpu_custom_call.1} parent=1 // pred_check_branch
      %101 = sbr.rel (%p99) target = $region25
    $region24: #{tpu_custom_call.1} parent=1 // pred_region
      %v102 = vld [vmem:[%s1] sm:$0xf]
      %v103 = vld [vmem:[%s2] sm:$0x1]
      %v104 = vld [vmem:[#allocation2] sm:$0x3]
      %v105 = vmul.f32 %v104, 0.00390625
      %vm106 = vcmask 31744
      %v108 = vsel %vm106, %v105, 0
      %v111 = vsel %vm45, %v102, 0
      %113 = vmatprep.subr.mxu0 0.0
      %114 = vmatpush1.msra.mxu0 %v111
      %115 = vmatprep.subr.mxu0 0.0
      %116 = vmatpush1.msra.mxu0 0.0
      %117 = vmatprep.subr.mxu0 0.0
      %118 = vmatpush1.msra.mxu0 0.0
      %119 = vmatprep.subr.mxu0 0.0
      %120 = vmatpush1.msra.mxu0 0.0
      %121 = vmatprep.subr.mxu0 0.0
      %122 = vmatpush1.msra.mxu0 0.0
      %123 = vmatprep.subr.mxu0 0.0
      %124 = vmatpush1.msra.mxu0 0.0
      %125 = vmatprep.subr.mxu0 0.0
      %126 = vmatpush1.msra.mxu0 0.0
      %127 = vmatprep.subr.mxu0 0.0
      %128 = vmatpush1.msra.mxu0 0.0
      %129 = vmatprep.subr.mxu0 0.0
      %130 = vmatpush1.msra.mxu0 0.0
      %131 = vmatprep.subr.mxu0 0.0
      %132 = vmatpush1.msra.mxu0 0.0
      %133 = vmatprep.subr.mxu0 0.0
      %134 = vmatpush1.msra.mxu0 0.0
      %135 = vmatprep.subr.mxu0 0.0
      %136 = vmatpush1.msra.mxu0 0.0
      %137 = vmatprep.subr.mxu0 0.0
      %138 = vmatpush1.msra.mxu0 0.0
      %139 = vmatprep.subr.mxu0 0.0
      %140 = vmatpush1.msra.mxu0 0.0
      %141 = vmatprep.subr.mxu0 0.0
      %142 = vmatpush1.msra.mxu0 0.0
      %143 = vmatprep.subr.mxu0 0.0
      %144 = vmatpush1.msra.mxu0 0.0
      %145 = vmatprep.subr.mxu0 0.0
      %146 = vmatpush1.msra.mxu0 0.0
      %147 = vmatprep.subr.mxu0 0.0
      %148 = vmatpush1.msra.mxu0 0.0
      %149 = vmatprep.subr.mxu0 0.0
      %150 = vmatpush1.msra.mxu0 0.0
      %151 = vmatprep.subr.mxu0 0.0
      %152 = vmatpush1.msra.mxu0 0.0
      %153 = vmatprep.subr.mxu0 0.0
      %154 = vmatpush1.msra.mxu0 0.0
      %155 = vmatprep.subr.mxu0 0.0
      %156 = vmatpush1.msra.mxu0 0.0
      %157 = vmatprep.subr.mxu0 0.0
      %158 = vmatpush1.msra.mxu0 0.0
      %159 = vmatprep.subr.mxu0 0.0
      %160 = vmatpush1.msra.mxu0 0.0
      %161 = vmatprep.subr.mxu0 0.0
      %162 = vmatpush1.msra.mxu0 0.0
      %163 = vmatprep.subr.mxu0 0.0
      %164 = vmatpush1.msra.mxu0 0.0
      %165 = vmatprep.subr.mxu0 0.0
      %166 = vmatpush1.msra.mxu0 0.0
      %167 = vmatprep.subr.mxu0 0.0
      %168 = vmatpush1.msra.mxu0 0.0
      %169 = vmatprep.subr.mxu0 0.0
      %170 = vmatpush1.msra.mxu0 0.0
      %171 = vmatprep.subr.mxu0 0.0
      %172 = vmatpush1.msra.mxu0 0.0
      %173 = vmatprep.subr.mxu0 0.0
      %174 = vmatpush1.msra.mxu0 0.0
      %175 = vmatprep.subr.mxu0 0.0
      %176 = vmatpush1.msra.mxu0 0.0
      %177 = vmatprep.mubr.f32.mxu0 0.0
      %178 = vmatmul.mubr.f32.gmra.mrb[0].mxu0 %v108
      %v179 = vpop.f32.mrb[0].mxu0
      %v180 = vadd.f32 0.0, %v179
      %v181 = vpop.f32.mrb[0].mxu0
      %182 = vdwg.mxu0
      %v183 = vmax.f32 %v180, 0.0
      %v184 = vld [vmem:[#allocation3] sm:$0x3]
      %v186 = vsel %vm106, %v184, 0
      %188 = vmatprep.subr.mxu0 0.0
      %189 = vmatpush1.msra.mxu0 %v111
      %190 = vmatprep.subr.mxu0 0.0
      %191 = vmatpush1.msra.mxu0 0.0
      %192 = vmatprep.subr.mxu0 0.0
      %193 = vmatpush1.msra.mxu0 0.0
      %194 = vmatprep.subr.mxu0 0.0
      %195 = vmatpush1.msra.mxu0 0.0
      %196 = vmatprep.subr.mxu0 0.0
      %197 = vmatpush1.msra.mxu0 0.0
      %198 = vmatprep.subr.mxu0 0.0
      %199 = vmatpush1.msra.mxu0 0.0
      %200 = vmatprep.subr.mxu0 0.0
      %201 = vmatpush1.msra.mxu0 0.0
      %202 = vmatprep.subr.mxu0 0.0
      %203 = vmatpush1.msra.mxu0 0.0
      %204 = vmatprep.subr.mxu0 0.0
      %205 = vmatpush1.msra.mxu0 0.0
      %206 = vmatprep.subr.mxu0 0.0
      %207 = vmatpush1.msra.mxu0 0.0
      %208 = vmatprep.subr.mxu0 0.0
      %209 = vmatpush1.msra.mxu0 0.0
      %210 = vmatprep.subr.mxu0 0.0
      %211 = vmatpush1.msra.mxu0 0.0
      %212 = vmatprep.subr.mxu0 0.0
      %213 = vmatpush1.msra.mxu0 0.0
      %214 = vmatprep.subr.mxu0 0.0
      %215 = vmatpush1.msra.mxu0 0.0
      %216 = vmatprep.subr.mxu0 0.0
      %217 = vmatpush1.msra.mxu0 0.0
      %218 = vmatprep.subr.mxu0 0.0
      %219 = vmatpush1.msra.mxu0 0.0
      %220 = vmatprep.subr.mxu0 0.0
      %221 = vmatpush1.msra.mxu0 0.0
      %222 = vmatprep.subr.mxu0 0.0
      %223 = vmatpush1.msra.mxu0 0.0
      %224 = vmatprep.subr.mxu0 0.0
      %225 = vmatpush1.msra.mxu0 0.0
      %226 = vmatprep.subr.mxu0 0.0
      %227 = vmatpush1.msra.mxu0 0.0
      %228 = vmatprep.subr.mxu0 0.0
      %229 = vmatpush1.msra.mxu0 0.0
      %230 = vmatprep.subr.mxu0 0.0
      %231 = vmatpush1.msra.mxu0 0.0
      %232 = vmatprep.subr.mxu0 0.0
      %233 = vmatpush1.msra.mxu0 0.0
      %234 = vmatprep.subr.mxu0 0.0
      %235 = vmatpush1.msra.mxu0 0.0
      %236 = vmatprep.subr.mxu0 0.0
      %237 = vmatpush1.msra.mxu0 0.0
      %238 = vmatprep.subr.mxu0 0.0
      %239 = vmatpush1.msra.mxu0 0.0
      %240 = vmatprep.subr.mxu0 0.0
      %241 = vmatpush1.msra.mxu0 0.0
      %242 = vmatprep.subr.mxu0 0.0
      %243 = vmatpush1.msra.mxu0 0.0
      %244 = vmatprep.subr.mxu0 0.0
      %245 = vmatpush1.msra.mxu0 0.0
      %246 = vmatprep.subr.mxu0 0.0
      %247 = vmatpush1.msra.mxu0 0.0
      %248 = vmatprep.subr.mxu0 0.0
      %249 = vmatpush1.msra.mxu0 0.0
      %250 = vmatprep.subr.mxu0 0.0
      %251 = vmatpush1.msra.mxu0 0.0
      %252 = vmatprep.mubr.f32.mxu0 0.0
      %253 = vmatmul.mubr.f32.gmra.mrb[0].mxu0 %v186
      %v254 = vpop.f32.mrb[0].mxu0
      %v255 = vadd.f32 0.0, %v254
      %v256 = vpop.f32.mrb[0].mxu0
      %257 = vdwg.mxu0
      %v258 = vmax.f32 %v255, 0.0
      %vm259 = vcmask 7168
      %v261 = vsel %vm259, %v258, 0
      %vm263 = vcmask 1040384
      %v265 = vsel %vm263, %v103, 0
      %267 = vmatprep.subr.mxu0 0.0
      %268 = vmatpush1.msra.mxu0 %v265
      %269 = vmatprep.subr.mxu0 0.0
      %270 = vmatpush1.msra.mxu0 0.0
      %271 = vmatprep.subr.mxu0 0.0
      %272 = vmatpush1.msra.mxu0 0.0
      %273 = vmatprep.subr.mxu0 0.0
      %274 = vmatpush1.msra.mxu0 0.0
      %275 = vmatprep.subr.mxu0 0.0
      %276 = vmatpush1.msra.mxu0 0.0
      %277 = vmatprep.subr.mxu0 0.0
      %278 = vmatpush1.msra.mxu0 0.0
      %279 = vmatprep.subr.mxu0 0.0
      %280 = vmatpush1.msra.mxu0 0.0
      %281 = vmatprep.subr.mxu0 0.0
      %282 = vmatpush1.msra.mxu0 0.0
      %283 = vmatprep.subr.mxu0 0.0
      %284 = vmatpush1.msra.mxu0 0.0
      %285 = vmatprep.subr.mxu0 0.0
      %286 = vmatpush1.msra.mxu0 0.0
      %287 = vmatprep.subr.mxu0 0.0
      %288 = vmatpush1.msra.mxu0 0.0
      %289 = vmatprep.subr.mxu0 0.0
      %290 = vmatpush1.msra.mxu0 0.0
      %291 = vmatprep.subr.mxu0 0.0
      %292 = vmatpush1.msra.mxu0 0.0
      %293 = vmatprep.subr.mxu0 0.0
      %294 = vmatpush1.msra.mxu0 0.0
      %295 = vmatprep.subr.mxu0 0.0
      %296 = vmatpush1.msra.mxu0 0.0
      %297 = vmatprep.subr.mxu0 0.0
      %298 = vmatpush1.msra.mxu0 0.0
      %299 = vmatprep.subr.mxu0 0.0
      %300 = vmatpush1.msra.mxu0 0.0
      %301 = vmatprep.subr.mxu0 0.0
      %302 = vmatpush1.msra.mxu0 0.0
      %303 = vmatprep.subr.mxu0 0.0
      %304 = vmatpush1.msra.mxu0 0.0
      %305 = vmatprep.subr.mxu0 0.0
      %306 = vmatpush1.msra.mxu0 0.0
      %307 = vmatprep.subr.mxu0 0.0
      %308 = vmatpush1.msra.mxu0 0.0
      %309 = vmatprep.subr.mxu0 0.0
      %310 = vmatpush1.msra.mxu0 0.0
      %311 = vmatprep.subr.mxu0 0.0
      %312 = vmatpush1.msra.mxu0 0.0
      %313 = vmatprep.subr.mxu0 0.0
      %314 = vmatpush1.msra.mxu0 0.0
      %315 = vmatprep.subr.mxu0 0.0
      %316 = vmatpush1.msra.mxu0 0.0
      %317 = vmatprep.subr.mxu0 0.0
      %318 = vmatpush1.msra.mxu0 0.0
      %319 = vmatprep.subr.mxu0 0.0
      %320 = vmatpush1.msra.mxu0 0.0
      %321 = vmatprep.subr.mxu0 0.0
      %322 = vmatpush1.msra.mxu0 0.0
      %323 = vmatprep.subr.mxu0 0.0
      %324 = vmatpush1.msra.mxu0 0.0
      %325 = vmatprep.subr.mxu0 0.0
      %326 = vmatpush1.msra.mxu0 0.0
      %327 = vmatprep.subr.mxu0 0.0
      %328 = vmatpush1.msra.mxu0 0.0
      %329 = vmatprep.subr.mxu0 0.0
      %330 = vmatpush1.msra.mxu0 0.0
      %331 = vmatprep.mubr.f32.mxu0 0.0
      %332 = vmatmul.mubr.f32.gmra.mrb[0].mxu0 %v261
      %v333 = vpop.f32.mrb[0].mxu0
      %v334 = vadd.f32 0.0, %v333
      %v335 = vpop.f32.mrb[0].mxu0
      %336 = vdwg.mxu0
      %v338 = vsel %vm259, %v183, 0
      %340 = vmatprep.subr.mxu0 0.0
      %341 = vmatpush1.msra.mxu0 %v265
      %342 = vmatprep.subr.mxu0 0.0
      %343 = vmatpush1.msra.mxu0 0.0
      %344 = vmatprep.subr.mxu0 0.0
      %345 = vmatpush1.msra.mxu0 0.0
      %346 = vmatprep.subr.mxu0 0.0
      %347 = vmatpush1.msra.mxu0 0.0
      %348 = vmatprep.subr.mxu0 0.0
      %349 = vmatpush1.msra.mxu0 0.0
      %350 = vmatprep.subr.mxu0 0.0
      %351 = vmatpush1.msra.mxu0 0.0
      %352 = vmatprep.subr.mxu0 0.0
      %353 = vmatpush1.msra.mxu0 0.0
      %354 = vmatprep.subr.mxu0 0.0
      %355 = vmatpush1.msra.mxu0 0.0
      %356 = vmatprep.subr.mxu0 0.0
      %357 = vmatpush1.msra.mxu0 0.0
      %358 = vmatprep.subr.mxu0 0.0
      %359 = vmatpush1.msra.mxu0 0.0
      %360 = vmatprep.subr.mxu0 0.0
      %361 = vmatpush1.msra.mxu0 0.0
      %362 = vmatprep.subr.mxu0 0.0
      %363 = vmatpush1.msra.mxu0 0.0
      %364 = vmatprep.subr.mxu0 0.0
      %365 = vmatpush1.msra.mxu0 0.0
      %366 = vmatprep.subr.mxu0 0.0
      %367 = vmatpush1.msra.mxu0 0.0
      %368 = vmatprep.subr.mxu0 0.0
      %369 = vmatpush1.msra.mxu0 0.0
      %370 = vmatprep.subr.mxu0 0.0
      %371 = vmatpush1.msra.mxu0 0.0
      %372 = vmatprep.subr.mxu0 0.0
      %373 = vmatpush1.msra.mxu0 0.0
      %374 = vmatprep.subr.mxu0 0.0
      %375 = vmatpush1.msra.mxu0 0.0
      %376 = vmatprep.subr.mxu0 0.0
      %377 = vmatpush1.msra.mxu0 0.0
      %378 = vmatprep.subr.mxu0 0.0
      %379 = vmatpush1.msra.mxu0 0.0
      %380 = vmatprep.subr.mxu0 0.0
      %381 = vmatpush1.msra.mxu0 0.0
      %382 = vmatprep.subr.mxu0 0.0
      %383 = vmatpush1.msra.mxu0 0.0
      %384 = vmatprep.subr.mxu0 0.0
      %385 = vmatpush1.msra.mxu0 0.0
      %386 = vmatprep.subr.mxu0 0.0
      %387 = vmatpush1.msra.mxu0 0.0
      %388 = vmatprep.subr.mxu0 0.0
      %389 = vmatpush1.msra.mxu0 0.0
      %390 = vmatprep.subr.mxu0 0.0
      %391 = vmatpush1.msra.mxu0 0.0
      %392 = vmatprep.subr.mxu0 0.0
      %393 = vmatpush1.msra.mxu0 0.0
      %394 = vmatprep.subr.mxu0 0.0
      %395 = vmatpush1.msra.mxu0 0.0
      %396 = vmatprep.subr.mxu0 0.0
      %397 = vmatpush1.msra.mxu0 0.0
      %398 = vmatprep.subr.mxu0 0.0
      %399 = vmatpush1.msra.mxu0 0.0
      %400 = vmatprep.subr.mxu0 0.0
      %401 = vmatpush1.msra.mxu0 0.0
      %402 = vmatprep.subr.mxu0 0.0
      %403 = vmatpush1.msra.mxu0 0.0
      %404 = vmatprep.mubr.f32.mxu0 0.0
      %405 = vmatmul.mubr.f32.gmra.mrb[0].mxu0 %v338
      %v406 = vpop.f32.mrb[0].mxu0
      %v407 = vadd.f32 %v334, %v406
      %v408 = vpop.f32.mrb[0].mxu0
      %409 = vdwg.mxu0
      %v410 = vxor.u32 %v407, 2147483648
      %v411 = vmul.f32 %v410, 1.442695
      %v412 = vpow.pop %v411
      %v413 = vadd.f32 %v412, 1.0
      %v414 = vrcp.pop %v413
      %v415 = vmul.f32 1.0, %v414
      %416 = vst.msk [vmem:[#allocation7] sm:$0x3] %vm72, %v415
    $region25: #{tpu_custom_call.1} parent=1 // pred_fallthru
      _
    // Predicated region
    $region26: #{tpu_custom_call.1} parent=1 // pred_check
      _
    $region27: #{tpu_custom_call.1} parent=1 // pred_check_branch
      %418 = sbr.rel (0) target = $region29
    $region28: #{tpu_custom_call.1} parent=1 // pred_region
      %s420 = ssub.s32 32, 32
      %421 = vsyncadd [#allocation6], %s420
      %s423 = sshll.u32 [#allocation7], 4
      %s424 = int_to_ptr.vmem [resolvable:$true] %s423
      %426 = dma.vmem_to_hbm [thread:$0]  %s424, 32, %s3, [#allocation6]
    $region29: #{tpu_custom_call.1} parent=1 // pred_fallthru
      _
    // Predicated region
    $region30: #{tpu_custom_call.1} parent=1 // pred_check
      _
    $region31: #{tpu_custom_call.1} parent=1 // pred_check_branch
      %428 = sbr.rel (0) target = $region33
    $region32: #{tpu_custom_call.1} parent=1 // pred_region
      %429 = dma.done [#allocation6], 32
    $region33: #{tpu_custom_call.1} parent=1 // pred_fallthru
      _
    %430 = vsyncpa [#allocation5], 1
    %431 = vsyncpa [#allocation6], 1

</llo_original>
